<compile_context>
chip_gen: v5e
topology: v5e:2x2
jax: 0.10.0
libtpu: 0.0.40
codegen_flags: <defaults>
</compile_context>

<pallas_src>
import functools

import jax
import jax.numpy as jnp
from jax import lax
from jax.experimental import pallas as pl
from jax.experimental.pallas import tpu as pltpu

LANE = 128        # TPU lane width
CHUNK_ROWS = 64   # inner-loop chunk: (64,128) f32 = 8 vregs per input


def _round_up(x, m):
    return (x + m - 1) // m * m


def _sigmoid(x):
    # tanh-based sigmoid: one EUP op (tanh) + 3 VPU ops.  Avoids the
    # Newton-Raphson VALU divide jax.nn.sigmoid would lower to.
    return 0.5 * (jnp.tanh(0.5 * x) + 1.0)


def _accumulate_block(x_ref, t_ref, acc_ref, *, block_rows, unroll,
                      rows_left=None):
    """Fold one (block_rows, 128) tile into the resident (8,128) accumulators.

    rows_left=None -> unmasked fast path.  Otherwise rows past `rows_left`
    (boundary block / clamped over-step) are zeroed before accumulation.
    """
    nchunks = block_rows // CHUNK_ROWS
    zero = jnp.zeros((8, LANE), jnp.float32)

    def body(j, carry):
        inter, den = carry
        r0 = pl.multiple_of(j * CHUNK_ROWS, CHUNK_ROWS)
        xv = x_ref[pl.ds(r0, CHUNK_ROWS), :].astype(jnp.float32)
        tv = t_ref[pl.ds(r0, CHUNK_ROWS), :].astype(jnp.float32)
        s = _sigmoid(xv)
        if rows_left is not None:
            row_ids = lax.broadcasted_iota(jnp.int32, (CHUNK_ROWS, LANE), 0)
            valid = (r0 + row_ids) < rows_left
            s = jnp.where(valid, s, 0.0)      # mask after sigmoid: garbage/NaN -> 0
            tv = jnp.where(valid, tv, 0.0)
        # Tile-aligned VPU fold of the (64,128) chunk down to one (8,128) vreg.
        inter = inter + (s * tv).reshape(CHUNK_ROWS // 8, 8, LANE).sum(axis=0)
        den = den + (s + tv).reshape(CHUNK_ROWS // 8, 8, LANE).sum(axis=0)
        return inter, den

    inter, den = lax.fori_loop(0, nchunks, body, (zero, zero), unroll=unroll)
    acc_ref[0, 0] += inter
    acc_ref[0, 1] += den


def _dice_partial_kernel(x_ref, t_ref, acc_ref, *, rows, block_rows,
                         steps_per_core, needs_mask, unroll):
    i = pl.program_id(1)   # reduction ("arbitrary") axis

    @pl.when(i == 0)
    def _():
        acc_ref[...] = jnp.zeros_like(acc_ref)

    if not needs_mask:
        _accumulate_block(x_ref, t_ref, acc_ref,
                          block_rows=block_rows, unroll=unroll)
    else:
        c = pl.program_id(0)
        rows_left = rows - (c * steps_per_core + i) * block_rows
        is_full = rows_left >= block_rows

        @pl.when(is_full)
        def _():
            _accumulate_block(x_ref, t_ref, acc_ref,
                              block_rows=block_rows, unroll=unroll)

        @pl.when(jnp.logical_not(is_full))
        def _():
            _accumulate_block(x_ref, t_ref, acc_ref,
                              block_rows=block_rows, unroll=unroll,
                              rows_left=rows_left)


def _tpu_device_kind():
    try:
        return jax.devices()[0].device_kind.lower()
    except Exception:
        return ""


def dice_loss(inputs, targets, smooth=1.0):
    """Matches torch DiceLoss forward pass (sigmoid + global dice)."""
    x = inputs.reshape(-1)
    t = targets.reshape(-1)
    n = x.shape[0]

    n_main = (n // LANE) * LANE
    rows = n_main // LANE

    if n_main != n:
        # Sub-128 tail handled with plain jnp (tiny); zero-copy path below
        # when n % 128 == 0 (the common segmentation case).
        xt = x[n_main:].astype(jnp.float32)
        tt = t[n_main:].astype(jnp.float32)
        st = jax.nn.sigmoid(xt)
        tail_inter = jnp.sum(st * tt)
        tail_den = jnp.sum(st) + jnp.sum(tt)
        # TODO(synk): this prefix slice materializes an HBM copy of both big
        # tensors (only when n % 128 != 0); the copy-free alternative is 1-D
        # blocking of the flat array with an in-kernel reshape, kept off the
        # default path here to stay on the well-supported 2-D layout.
        x = x[:n_main]
        t = t[:n_main]
    else:
        tail_inter = jnp.float32(0.0)
        tail_den = jnp.float32(0.0)

    if rows == 0:
        dice = (2.0 * tail_inter + smooth) / (tail_den + smooth)
        return (1.0 - dice).astype(jnp.float32)

    x2 = x.reshape(rows, LANE)   # free reshape (n_main == rows * 128)
    t2 = t.reshape(rows, LANE)

    # Per-generation tuning.
    kind = _tpu_device_kind()
    is_v7 = ("v7" in kind) or ("7x" in kind)
    has_big_vmem = ("v6" in kind) or is_v7
    max_rows = 8192 if has_big_vmem else 4096          # f32: 16 MiB vs 8 MiB dbl-buffered
    vmem_limit = (48 * 1024 * 1024) if has_big_vmem else None
    num_cores = 2 if is_v7 else 1                      # 2 TCs only on v7x

    # block_rows multiple of 64 satisfies f32/bf16/int8 sublane packing and
    # divides evenly into the 64-row inner chunks.
    block_rows = min(max_rows, _round_up(rows, CHUNK_ROWS))
    num_blocks = pl.cdiv(rows, block_rows)
    nc = min(num_cores, num_blocks)
    spc = pl.cdiv(num_blocks, nc)                      # reduction steps per core
    needs_mask = (rows % block_rows != 0) or (nc * spc != num_blocks)

    nchunks = block_rows // CHUNK_ROWS
    unroll = 4 if nchunks % 4 == 0 else (2 if nchunks % 2 == 0 else 1)

    def in_map(c, i):
        # Clamp so extra steps (odd block counts across cores) re-read the last
        # valid block; the in-kernel masked branch zeroes their contribution.
        return (jnp.minimum(c * spc + i, num_blocks - 1), 0)

    kernel = functools.partial(
        _dice_partial_kernel, rows=rows, block_rows=block_rows,
        steps_per_core=spc, needs_mask=needs_mask, unroll=unroll)

    acc_shape = jax.ShapeDtypeStruct((nc, 2, 8, LANE), jnp.float32)
    acc_spec = pl.BlockSpec((1, 2, 8, LANE), lambda c, i: (c, 0, 0, 0))

    acc = pl.pallas_call(
        kernel,
        out_shape=acc_shape,
        grid_spec=pltpu.PrefetchScalarGridSpec(
            num_scalar_prefetch=0,
            grid=(nc, spc),
            in_specs=[
                pl.BlockSpec((block_rows, LANE), in_map),
                pl.BlockSpec((block_rows, LANE), in_map),
            ],
            out_specs=acc_spec,
        ),
        compiler_params=pltpu.CompilerParams(
            dimension_semantics=("parallel", "arbitrary"),
            vmem_limit_bytes=vmem_limit),
    )(x2, t2)

    intersection = jnp.sum(acc[:, 0]) + tail_inter
    denom = jnp.sum(acc[:, 1]) + tail_den
    dice = (2.0 * intersection + smooth) / (denom + smooth)
    return 1.0 - dice


def dice_loss_ref(inputs, targets, smooth=1.0):
    s = jax.nn.sigmoid(inputs.astype(jnp.float32)).reshape(-1)
    t = targets.astype(jnp.float32).reshape(-1)
    inter = jnp.sum(s * t)
    dice = (2.0 * inter + smooth) / (jnp.sum(s) + jnp.sum(t) + smooth)
    return 1.0 - dice


if __name__ == "__main__":
    key = jax.random.PRNGKey(0)
    k1, k2, k3, k4, k5, k6 = jax.random.split(key, 6)

    # Case 1: segmentation-style f32 logits [B, C, H, W], binary f32 targets.
    B, C, H, W = 2, 4, 16, 16
    logits = jax.random.normal(k1, (B, C, H, W), dtype=jnp.float32)
    targets = (jax.random.uniform(k2, (B, C, H, W)) > 0.5).astype(jnp.float32)
    loss = jax.block_until_ready(dice_loss(logits, targets, smooth=1.0))
    ref = dice_loss_ref(logits, targets, smooth=1.0)
    assert jnp.allclose(loss, ref, atol=1e-4, rtol=1e-4), (loss, ref)

    # Case 2: size not a multiple of 128 -> boundary-block mask + jnp tail path.
    B2, C2, H2, W2 = 2, 3, 20, 20
    logits2 = jax.random.normal(k3, (B2, C2, H2, W2), dtype=jnp.float32)
    targets2 = (jax.random.uniform(k4, (B2, C2, H2, W2)) > 0.5).astype(jnp.float32)
    loss2 = jax.block_until_ready(dice_loss(logits2, targets2, smooth=1.0))
    ref2 = dice_loss_ref(logits2, targets2, smooth=1.0)
    assert jnp.allclose(loss2, ref2, atol=1e-4, rtol=1e-4), (loss2, ref2)

    # Case 3: reduced-precision inputs (bf16 logits, int8 targets) stream
    # directly; casts happen in-VMEM inside the kernel.
    logits3 = jax.random.normal(k5, (B, C, H, W), dtype=jnp.bfloat16)
    targets3 = (jax.random.uniform(k6, (B, C, H, W)) > 0.5).astype(jnp.int8)
    loss3 = jax.block_until_ready(dice_loss(logits3, targets3, smooth=1.0))
    ref3 = dice_loss_ref(logits3, targets3, smooth=1.0)
    assert jnp.allclose(loss3, ref3, atol=2e-4, rtol=2e-4), (loss3, ref3)

    print("KERNEL_OK")
</pallas_src>

<mosaic_0001>
module attributes {stable_mosaic.version = 11 : i64} {
  func.func @_dice_partial_kernel(%arg0: i32, %arg1: i32, %arg2: memref<64x128xf32, #tpu.memory_space<vmem>>, %arg3: memref<64x128xf32, #tpu.memory_space<vmem>>, %arg4: memref<1x2x8x128xf32, #tpu.memory_space<vmem>>) attributes {dimension_semantics = [#tpu.dimension_semantics<parallel>, #tpu.dimension_semantics<arbitrary>], iteration_bounds = array<i64: 1, 1>, scalar_prefetch = 0 : i64, scratch_operands = 0 : i64, tpu.core_type = #tpu.core_type<tc>, window_params = [{transform_indices = @transform_0, window_bounds = array<i64: 64, 128>}, {transform_indices = @transform_1, window_bounds = array<i64: 64, 128>}, {transform_indices = @transform_2, window_bounds = array<i64: 1, 2, 8, 128>}]} {
    %c0_i32 = arith.constant 0 : i32
    %0 = arith.cmpi eq, %arg1, %c0_i32 : i32
    %1 = arith.extui %0 : i1 to i32
    %c0_i32_0 = arith.constant 0 : i32
    %2 = arith.cmpi ne, %1, %c0_i32_0 : i32
    scf.if %2 {
      %cst = arith.constant 0.000000e+00 : f32
      %13 = vector.broadcast %cst : f32 to vector<1x2x8x128xf32>
      %c0 = arith.constant 0 : index
      %c0_4 = arith.constant 0 : index
      %c0_5 = arith.constant 0 : index
      %c0_6 = arith.constant 0 : index
      %14 = vector.load %arg4[%c0, %c0_4, %c0_5, %c0_6] : memref<1x2x8x128xf32, #tpu.memory_space<vmem>>, vector<1x2x8x128xf32>
      tpu.vector_store %arg4[%c0, %c0_4, %c0_5, %c0_6], %13 {strides = array<i32>} : memref<1x2x8x128xf32, #tpu.memory_space<vmem>>, vector<1x2x8x128xf32>,
    } else {
    }
    %c1_i32 = arith.constant 1 : i32
    %3 = arith.muli %arg0, %c1_i32 : i32
    %4 = arith.addi %3, %arg1 : i32
    %c64_i32 = arith.constant 64 : i32
    %5 = arith.muli %4, %c64_i32 : i32
    %c16_i32 = arith.constant 16 : i32
    %6 = arith.subi %c16_i32, %5 : i32
    %c64_i32_1 = arith.constant 64 : i32
    %7 = arith.cmpi sge, %6, %c64_i32_1 : i32
    %8 = arith.extui %7 : i1 to i32
    %c0_i32_2 = arith.constant 0 : i32
    %9 = arith.cmpi ne, %8, %c0_i32_2 : i32
    scf.if %9 {
      %cst = arith.constant 0.000000e+00 : f32
      %13 = vector.broadcast %cst : f32 to vector<8x128xf32>
      %c0_i32_4 = arith.constant 0 : i32
      %c64_i32_5 = arith.constant 64 : i32
      %14 = arith.muli %c0_i32_4, %c64_i32_5 : i32
      %15 = tpu.assume_multiple %14, 64 : i32
      %16 = arith.index_cast %15 : i32 to index
      %c0 = arith.constant 0 : index
      %17 = vector.load %arg2[%16, %c0] : memref<64x128xf32, #tpu.memory_space<vmem>>, vector<64x128xf32>
      %18 = arith.index_cast %15 : i32 to index
      %c0_6 = arith.constant 0 : index
      %19 = vector.load %arg3[%18, %c0_6] : memref<64x128xf32, #tpu.memory_space<vmem>>, vector<64x128xf32>
      %cst_7 = arith.constant 5.000000e-01 : f32
      %20 = vector.broadcast %cst_7 : f32 to vector<64x128xf32>
      %21 = arith.mulf %20, %17 : vector<64x128xf32>
      %22 = math.tanh %21 : vector<64x128xf32>
      %cst_8 = arith.constant 1.000000e+00 : f32
      %23 = vector.broadcast %cst_8 : f32 to vector<64x128xf32>
      %24 = arith.addf %22, %23 : vector<64x128xf32>
      %cst_9 = arith.constant 5.000000e-01 : f32
      %25 = vector.broadcast %cst_9 : f32 to vector<64x128xf32>
      %26 = arith.mulf %25, %24 : vector<64x128xf32>
      %27 = arith.mulf %26, %19 : vector<64x128xf32>
      %28 = vector.shape_cast %27 : vector<64x128xf32> to vector<8x8x128xf32>
      %cst_10 = arith.constant dense<0.000000e+00> : vector<8x128xf32>
      %29 = vector.multi_reduction <add>, %28, %cst_10 [0] : vector<8x8x128xf32> to vector<8x128xf32>
      %30 = arith.addf %13, %29 : vector<8x128xf32>
      %31 = arith.addf %26, %19 : vector<64x128xf32>
      %32 = vector.shape_cast %31 : vector<64x128xf32> to vector<8x8x128xf32>
      %cst_11 = arith.constant dense<0.000000e+00> : vector<8x128xf32>
      %33 = vector.multi_reduction <add>, %32, %cst_11 [0] : vector<8x8x128xf32> to vector<8x128xf32>
      %34 = arith.addf %13, %33 : vector<8x128xf32>
      %c1_i32_12 = arith.constant 1 : i32
      %c0_13 = arith.constant 0 : index
      %c0_14 = arith.constant 0 : index
      %c0_15 = arith.constant 0 : index
      %c0_16 = arith.constant 0 : index
      %35 = vector.load %arg4[%c0_13, %c0_14, %c0_15, %c0_16] : memref<1x2x8x128xf32, #tpu.memory_space<vmem>>, vector<1x1x8x128xf32>
      %36 = vector.shape_cast %35 : vector<1x1x8x128xf32> to vector<8x128xf32>
      %37 = arith.addf %36, %30 : vector<8x128xf32>
      %c0_17 = arith.constant 0 : index
      %c0_18 = arith.constant 0 : index
      %c0_19 = arith.constant 0 : index
      %c0_20 = arith.constant 0 : index
      %38 = vector.load %arg4[%c0_17, %c0_18, %c0_19, %c0_20] : memref<1x2x8x128xf32, #tpu.memory_space<vmem>>, vector<1x1x8x128xf32>
      %39 = vector.shape_cast %38 : vector<1x1x8x128xf32> to vector<8x128xf32>
      %40 = vector.shape_cast %37 : vector<8x128xf32> to vector<1x1x8x128xf32>
      tpu.vector_store %arg4[%c0_17, %c0_18, %c0_19, %c0_20], %40 {strides = array<i32>} : memref<1x2x8x128xf32, #tpu.memory_space<vmem>>, vector<1x1x8x128xf32>,
      %c0_21 = arith.constant 0 : index
      %c1 = arith.constant 1 : index
      %c0_22 = arith.constant 0 : index
      %c0_23 = arith.constant 0 : index
      %41 = vector.load %arg4[%c0_21, %c1, %c0_22, %c0_23] : memref<1x2x8x128xf32, #tpu.memory_space<vmem>>, vector<1x1x8x128xf32>
      %42 = vector.shape_cast %41 : vector<1x1x8x128xf32> to vector<8x128xf32>
      %43 = arith.addf %42, %34 : vector<8x128xf32>
      %c0_24 = arith.constant 0 : index
      %c1_25 = arith.constant 1 : index
      %c0_26 = arith.constant 0 : index
      %c0_27 = arith.constant 0 : index
      %44 = vector.load %arg4[%c0_24, %c1_25, %c0_26, %c0_27] : memref<1x2x8x128xf32, #tpu.memory_space<vmem>>, vector<1x1x8x128xf32>
      %45 = vector.shape_cast %44 : vector<1x1x8x128xf32> to vector<8x128xf32>
      %46 = vector.shape_cast %43 : vector<8x128xf32> to vector<1x1x8x128xf32>
      tpu.vector_store %arg4[%c0_24, %c1_25, %c0_26, %c0_27], %46 {strides = array<i32>} : memref<1x2x8x128xf32, #tpu.memory_space<vmem>>, vector<1x1x8x128xf32>,
    } else {
    }
    %true = arith.constant true
    %10 = arith.xori %7, %true : i1
    %11 = arith.extui %10 : i1 to i32
    %c0_i32_3 = arith.constant 0 : i32
    %12 = arith.cmpi ne, %11, %c0_i32_3 : i32
    scf.if %12 {
      %cst = arith.constant 0.000000e+00 : f32
      %13 = vector.broadcast %cst : f32 to vector<8x128xf32>
      %c0_i32_4 = arith.constant 0 : i32
      %c64_i32_5 = arith.constant 64 : i32
      %14 = arith.muli %c0_i32_4, %c64_i32_5 : i32
      %15 = tpu.assume_multiple %14, 64 : i32
      %16 = arith.index_cast %15 : i32 to index
      %c0 = arith.constant 0 : index
      %17 = vector.load %arg2[%16, %c0] : memref<64x128xf32, #tpu.memory_space<vmem>>, vector<64x128xf32>
      %18 = arith.index_cast %15 : i32 to index
      %c0_6 = arith.constant 0 : index
      %19 = vector.load %arg3[%18, %c0_6] : memref<64x128xf32, #tpu.memory_space<vmem>>, vector<64x128xf32>
      %cst_7 = arith.constant 5.000000e-01 : f32
      %20 = vector.broadcast %cst_7 : f32 to vector<64x128xf32>
      %21 = arith.mulf %20, %17 : vector<64x128xf32>
      %22 = math.tanh %21 : vector<64x128xf32>
      %cst_8 = arith.constant 1.000000e+00 : f32
      %23 = vector.broadcast %cst_8 : f32 to vector<64x128xf32>
      %24 = arith.addf %22, %23 : vector<64x128xf32>
      %cst_9 = arith.constant 5.000000e-01 : f32
      %25 = vector.broadcast %cst_9 : f32 to vector<64x128xf32>
      %26 = arith.mulf %25, %24 : vector<64x128xf32>
      %27 = tpu.iota {dimensions = array<i32: 0>} : vector<64x128xi32>
      %28 = vector.broadcast %15 : i32 to vector<64x128xi32>
      %29 = arith.addi %28, %27 : vector<64x128xi32>
      %30 = vector.broadcast %6 : i32 to vector<64x128xi32>
      %31 = arith.cmpi slt, %29, %30 : vector<64x128xi32>
      %cst_10 = arith.constant 0.000000e+00 : f32
      %32 = vector.broadcast %cst_10 : f32 to vector<64x128xf32>
      %33 = arith.select %31, %26, %32 : vector<64x128xi1>, vector<64x128xf32>
      %cst_11 = arith.constant 0.000000e+00 : f32
      %34 = vector.broadcast %cst_11 : f32 to vector<64x128xf32>
      %35 = arith.select %31, %19, %34 : vector<64x128xi1>, vector<64x128xf32>
      %36 = arith.mulf %33, %35 : vector<64x128xf32>
      %37 = vector.shape_cast %36 : vector<64x128xf32> to vector<8x8x128xf32>
      %cst_12 = arith.constant dense<0.000000e+00> : vector<8x128xf32>
      %38 = vector.multi_reduction <add>, %37, %cst_12 [0] : vector<8x8x128xf32> to vector<8x128xf32>
      %39 = arith.addf %13, %38 : vector<8x128xf32>
      %40 = arith.addf %33, %35 : vector<64x128xf32>
      %41 = vector.shape_cast %40 : vector<64x128xf32> to vector<8x8x128xf32>
      %cst_13 = arith.constant dense<0.000000e+00> : vector<8x128xf32>
      %42 = vector.multi_reduction <add>, %41, %cst_13 [0] : vector<8x8x128xf32> to vector<8x128xf32>
      %43 = arith.addf %13, %42 : vector<8x128xf32>
      %c1_i32_14 = arith.constant 1 : i32
      %c0_15 = arith.constant 0 : index
      %c0_16 = arith.constant 0 : index
      %c0_17 = arith.constant 0 : index
      %c0_18 = arith.constant 0 : index
      %44 = vector.load %arg4[%c0_15, %c0_16, %c0_17, %c0_18] : memref<1x2x8x128xf32, #tpu.memory_space<vmem>>, vector<1x1x8x128xf32>
      %45 = vector.shape_cast %44 : vector<1x1x8x128xf32> to vector<8x128xf32>
      %46 = arith.addf %45, %39 : vector<8x128xf32>
      %c0_19 = arith.constant 0 : index
      %c0_20 = arith.constant 0 : index
      %c0_21 = arith.constant 0 : index
      %c0_22 = arith.constant 0 : index
      %47 = vector.load %arg4[%c0_19, %c0_20, %c0_21, %c0_22] : memref<1x2x8x128xf32, #tpu.memory_space<vmem>>, vector<1x1x8x128xf32>
      %48 = vector.shape_cast %47 : vector<1x1x8x128xf32> to vector<8x128xf32>
      %49 = vector.shape_cast %46 : vector<8x128xf32> to vector<1x1x8x128xf32>
      tpu.vector_store %arg4[%c0_19, %c0_20, %c0_21, %c0_22], %49 {strides = array<i32>} : memref<1x2x8x128xf32, #tpu.memory_space<vmem>>, vector<1x1x8x128xf32>,
      %c0_23 = arith.constant 0 : index
      %c1 = arith.constant 1 : index
      %c0_24 = arith.constant 0 : index
      %c0_25 = arith.constant 0 : index
      %50 = vector.load %arg4[%c0_23, %c1, %c0_24, %c0_25] : memref<1x2x8x128xf32, #tpu.memory_space<vmem>>, vector<1x1x8x128xf32>
      %51 = vector.shape_cast %50 : vector<1x1x8x128xf32> to vector<8x128xf32>
      %52 = arith.addf %51, %43 : vector<8x128xf32>
      %c0_26 = arith.constant 0 : index
      %c1_27 = arith.constant 1 : index
      %c0_28 = arith.constant 0 : index
      %c0_29 = arith.constant 0 : index
      %53 = vector.load %arg4[%c0_26, %c1_27, %c0_28, %c0_29] : memref<1x2x8x128xf32, #tpu.memory_space<vmem>>, vector<1x1x8x128xf32>
      %54 = vector.shape_cast %53 : vector<1x1x8x128xf32> to vector<8x128xf32>
      %55 = vector.shape_cast %52 : vector<8x128xf32> to vector<1x1x8x128xf32>
      tpu.vector_store %arg4[%c0_26, %c1_27, %c0_28, %c0_29], %55 {strides = array<i32>} : memref<1x2x8x128xf32, #tpu.memory_space<vmem>>, vector<1x1x8x128xf32>,
    } else {
    }
    return
  }
  func.func @transform_0(%arg0: i32, %arg1: i32) -> (i32, i32) {
    %c1_i32 = arith.constant 1 : i32
    %0 = arith.muli %arg0, %c1_i32 : i32
    %1 = arith.addi %0, %arg1 : i32
    %c0_i32 = arith.constant 0 : i32
    %2 = arith.minsi %1, %c0_i32 : i32
    %c0_i32_0 = arith.constant 0 : i32
    %c0_i32_1 = arith.constant 0 : i32
    return %2, %c0_i32_0 : i32, i32
  }
  func.func @transform_1(%arg0: i32, %arg1: i32) -> (i32, i32) {
    %c1_i32 = arith.constant 1 : i32
    %0 = arith.muli %arg0, %c1_i32 : i32
    %1 = arith.addi %0, %arg1 : i32
    %c0_i32 = arith.constant 0 : i32
    %2 = arith.minsi %1, %c0_i32 : i32
    %c0_i32_0 = arith.constant 0 : i32
    %c0_i32_1 = arith.constant 0 : i32
    return %2, %c0_i32_0 : i32, i32
  }
  func.func @transform_2(%arg0: i32, %arg1: i32) -> (i32, i32, i32, i32) {
    %c0_i32 = arith.constant 0 : i32
    %c0_i32_0 = arith.constant 0 : i32
    %c0_i32_1 = arith.constant 0 : i32
    %c0_i32_2 = arith.constant 0 : i32
    return %arg0, %c0_i32, %c0_i32_0, %c0_i32_1 : i32, i32, i32, i32
  }
}

</mosaic_0001>

<llo_original>
// kernel: tpu_custom_call.1
$region0: #{tpu_custom_call.1}
  #allocation0 [shape = 'u32[]', space=smem, size = 0x4, offset = 0x4, fixed_abs, tag = 'smem constant byte address 0x4 - core index']
  #allocation1 [shape = 'u32[72,128]{1,0:T(1,128)}', space=vmem, size = 0x9000, scoped, tag = 'internal scratch']
  %s0 = inlined_call_operand.hbm [shape: f32[16,128], index: 0, kind: input, shape index: {}]
  %s1 = inlined_call_operand.hbm [shape: f32[16,128], index: 1, kind: input, shape index: {}]
  %s2 = inlined_call_operand.hbm [shape: f32[1,2,8,128], index: 2, kind: output, shape index: {}]
  %s3 = sld [smem:[#allocation0]]
  $region38: #{tpu_custom_call.1} parent=0
    _
  %s5 = ssub.s32 1, %s3
  %s6 = scalar_select 0, %s5, %s3
  $region1: #{tpu_custom_call.1} parent=0
    #allocation2 [shape = 'u8[32768]{0}', space=vmem, size = 0x8000, scoped, tag = 'input window, operand 0, single buffered']
    #allocation3 [shape = 's32[1]{0}', space=sflag, size = 0x4, scoped, tag = 'scoped memory for tpu_custom_call.1']
    #allocation4 [shape = 's32[1]{0}', space=sflag, size = 0x4, scoped, tag = 'scoped memory for tpu_custom_call.1']
    #allocation5 [shape = 'u8[32768]{0}', space=vmem, size = 0x8000, scoped, tag = 'input window, operand 1, single buffered']
    #allocation6 [shape = 's32[1]{0}', space=sflag, size = 0x4, scoped, tag = 'scoped memory for tpu_custom_call.1']
    #allocation7 [shape = 'u8[8192]{0}', space=vmem, size = 0x2000, scoped, tag = 'output window, operand 0, single buffered']
    %7 = vsyncpa [#allocation3], 0
    %8 = vsyncpa [#allocation6], 0
    %9 = vsyncpa [#allocation4], 0
    // Predicated region
    $region2: #{tpu_custom_call.1} parent=1 // pred_check
      _
    $region3: #{tpu_custom_call.1} parent=1 // pred_check_branch
      %11 = sbr.rel (0) target = $region5
    $region4: #{tpu_custom_call.1} parent=1 // pred_region
      %s12 = sadd.s32 0, 0
      %p13 = scmp.lt.s32.totalorder %s12, 0
      %s14 = scalar_select %p13, %s12, 0
      %s15 = smul.u32 8, %s14
      %s16 = ssub.s32 2, %s15
      %s17 = smul.u32 8, %s16
      %s18 = ssub.s32 64, %s17
      %s19 = sshll.u32 %s18, 4
      %20 = vsyncadd [#allocation3], %s19
      %p21 = scmp.ne.s32.totalorder 0, %s17
      %s22 = smul.addr %s15, 8
      %s23 = scalar_lea.hbm %s0, %s22
      %s24 = smul.u32 8, %s16
      %s25 = sshll.u32 %s23, 4
      %s26 = int_to_ptr.hbm [resolvable:$true] %s25
      %s27 = sshll.u32 [#allocation2], 4
      %s28 = int_to_ptr.vmem [resolvable:$true] %s27
      %s29 = sshll.u32 %s24, 4
      %33 = dma.hbm_to_vmem [thread:$0]  (%p21), %s26, %s29, %s28, [#allocation3], 128, 128, 8
    $region5: #{tpu_custom_call.1} parent=1 // pred_fallthru
      _
    // Predicated region
    $region6: #{tpu_custom_call.1} parent=1 // pred_check
      _
    $region7: #{tpu_custom_call.1} parent=1 // pred_check_branch
      %35 = sbr.rel (0) target = $region9
    $region8: #{tpu_custom_call.1} parent=1 // pred_region
      %s36 = sadd.s32 0, 0
      %p37 = scmp.lt.s32.totalorder %s36, 0
      %s38 = scalar_select %p37, %s36, 0
      %s39 = smul.u32 8, %s38
      %s40 = ssub.s32 2, %s39
      %s41 = smul.u32 8, %s40
      %s42 = ssub.s32 64, %s41
      %s43 = sshll.u32 %s42, 4
      %44 = vsyncadd [#allocation6], %s43
      %p45 = scmp.ne.s32.totalorder 0, %s41
      %s46 = smul.addr %s39, 8
      %s47 = scalar_lea.hbm %s1, %s46
      %s48 = smul.u32 8, %s40
      %s49 = sshll.u32 %s47, 4
      %s50 = int_to_ptr.hbm [resolvable:$true] %s49
      %s51 = sshll.u32 [#allocation5], 4
      %s52 = int_to_ptr.vmem [resolvable:$true] %s51
      %s53 = sshll.u32 %s48, 4
      %57 = dma.hbm_to_vmem [thread:$0]  (%p45), %s50, %s53, %s52, [#allocation6], 128, 128, 8
    $region9: #{tpu_custom_call.1} parent=1 // pred_fallthru
      _
    // Predicated region
    $region10: #{tpu_custom_call.1} parent=1 // pred_check
      _
    $region11: #{tpu_custom_call.1} parent=1 // pred_check_branch
      %59 = sbr.rel (0) target = $region13
    $region12: #{tpu_custom_call.1} parent=1 // pred_region
      %61 = dma.done [#allocation3], 1024
    $region13: #{tpu_custom_call.1} parent=1 // pred_fallthru
      _
    // Predicated region
    $region14: #{tpu_custom_call.1} parent=1 // pred_check
      _
    $region15: #{tpu_custom_call.1} parent=1 // pred_check_branch
      %63 = sbr.rel (0) target = $region17
    $region16: #{tpu_custom_call.1} parent=1 // pred_region
      %65 = dma.done [#allocation6], 1024
    $region17: #{tpu_custom_call.1} parent=1 // pred_fallthru
      _
    %s66 = sadd.s32 0, 0
    %p67 = scmp.lt.s32.totalorder %s66, 0
    %s68 = scalar_select %p67, %s66, 0
    %s69 = smul.u32 8, %s68
    %s70 = ssub.s32 2, %s69
    %s71 = smul.u32 8, %s70
    %s72 = sadd.s32 0, 0
    %p73 = scmp.lt.s32.totalorder %s72, 0
    %s74 = scalar_select %p73, %s72, 0
    %s75 = smul.u32 8, %s74
    %s76 = ssub.s32 2, %s75
    %s77 = smul.u32 8, %s76
    %p78 = scmp.eq.s32.totalorder 0, 0
    // Predicated region
    $region18: #{tpu_custom_call.1} parent=1 // pred_check
      %p79 = pneg %p78
    $region19: #{tpu_custom_call.1} parent=1 // pred_check_branch
      %81 = sbr.rel (%p79) target = $region21
    $region20: #{tpu_custom_call.1} parent=1 // pred_region
      %82 = vst [vmem:[#allocation7] sm:$0xff] 0.0
      %83 = vst [vmem:[#allocation7 + $0x8] sm:$0xff] 0.0
    $region21: #{tpu_custom_call.1} parent=1 // pred_fallthru
      _
    %s84 = sadd.s32 0, 0
    %s85 = smul.u32 %s84, 64
    %s86 = ssub.s32 16, %s85
    %p87 = scmp.ge.s32.totalorder %s86, 64
    // Predicated region
    $region22: #{tpu_custom_call.1} parent=1 // pred_check
      %p88 = pneg %p87
    $region23: #{tpu_custom_call.1} parent=1 // pred_check_branch
      %90 = sbr.rel (%p88) target = $region25
    $region24: #{tpu_custom_call.1} parent=1 // pred_region
      %v91 = vld [vmem:[#allocation2] sm:$0xff]
      %v92 = vld [vmem:[#allocation2 + $0x8] sm:$0xff]
      %v93 = vld [vmem:[#allocation2 + $0x10] sm:$0xff]
      %v94 = vld [vmem:[#allocation2 + $0x18] sm:$0xff]
      %v95 = vld [vmem:[#allocation2 + $0x20] sm:$0xff]
      %v96 = vld [vmem:[#allocation2 + $0x28] sm:$0xff]
      %v97 = vld [vmem:[#allocation2 + $0x30] sm:$0xff]
      %v98 = vld [vmem:[#allocation2 + $0x38] sm:$0xff]
      %v99 = vld [vmem:[#allocation5] sm:$0xff]
      %v100 = vld [vmem:[#allocation5 + $0x8] sm:$0xff]
      %v101 = vld [vmem:[#allocation5 + $0x10] sm:$0xff]
      %v102 = vld [vmem:[#allocation5 + $0x18] sm:$0xff]
      %v103 = vld [vmem:[#allocation5 + $0x20] sm:$0xff]
      %v104 = vld [vmem:[#allocation5 + $0x28] sm:$0xff]
      %v105 = vld [vmem:[#allocation5 + $0x30] sm:$0xff]
      %v106 = vld [vmem:[#allocation5 + $0x38] sm:$0xff]
      %v107 = vmul.f32 %v91, 0.5
      %v108 = vmul.f32 %v92, 0.5
      %v109 = vmul.f32 %v93, 0.5
      %v110 = vmul.f32 %v94, 0.5
      %v111 = vmul.f32 %v95, 0.5
      %v112 = vmul.f32 %v96, 0.5
      %v113 = vmul.f32 %v97, 0.5
      %v114 = vmul.f32 %v98, 0.5
      %v115 = vtanh.pop %v107
      %v116 = vtanh.pop %v108
      %v117 = vtanh.pop %v109
      %v118 = vtanh.pop %v110
      %v119 = vtanh.pop %v111
      %v120 = vtanh.pop %v112
      %v121 = vtanh.pop %v113
      %v122 = vtanh.pop %v114
      %v123 = vadd.f32 %v115, 1.0
      %v124 = vadd.f32 %v116, 1.0
      %v125 = vadd.f32 %v117, 1.0
      %v126 = vadd.f32 %v118, 1.0
      %v127 = vadd.f32 %v119, 1.0
      %v128 = vadd.f32 %v120, 1.0
      %v129 = vadd.f32 %v121, 1.0
      %v130 = vadd.f32 %v122, 1.0
      %v131 = vmul.f32 %v123, 0.5
      %v132 = vmul.f32 %v124, 0.5
      %v133 = vmul.f32 %v125, 0.5
      %v134 = vmul.f32 %v126, 0.5
      %v135 = vmul.f32 %v127, 0.5
      %v136 = vmul.f32 %v128, 0.5
      %v137 = vmul.f32 %v129, 0.5
      %v138 = vmul.f32 %v130, 0.5
      %v139 = vmul.f32 %v131, %v99
      %v140 = vmul.f32 %v132, %v100
      %v141 = vmul.f32 %v133, %v101
      %v142 = vmul.f32 %v134, %v102
      %v143 = vmul.f32 %v135, %v103
      %v144 = vmul.f32 %v136, %v104
      %v145 = vmul.f32 %v137, %v105
      %v146 = vmul.f32 %v138, %v106
      %v147 = vadd.f32 %v139, %v140
      %v148 = vadd.f32 %v147, %v141
      %v149 = vadd.f32 %v148, %v142
      %v150 = vadd.f32 %v149, %v143
      %v151 = vadd.f32 %v150, %v144
      %v152 = vadd.f32 %v151, %v145
      %v153 = vadd.f32 %v152, %v146
      %v154 = vadd.f32 %v153, 0.0
      %v155 = vadd.f32 %v131, %v99
      %v156 = vadd.f32 %v132, %v100
      %v157 = vadd.f32 %v133, %v101
      %v158 = vadd.f32 %v134, %v102
      %v159 = vadd.f32 %v135, %v103
      %v160 = vadd.f32 %v136, %v104
      %v161 = vadd.f32 %v137, %v105
      %v162 = vadd.f32 %v138, %v106
      %v163 = vadd.f32 %v155, %v156
      %v164 = vadd.f32 %v163, %v157
      %v165 = vadd.f32 %v164, %v158
      %v166 = vadd.f32 %v165, %v159
      %v167 = vadd.f32 %v166, %v160
      %v168 = vadd.f32 %v167, %v161
      %v169 = vadd.f32 %v168, %v162
      %v170 = vadd.f32 %v169, 0.0
      %v171 = vld [vmem:[#allocation7] sm:$0xff]
      %v172 = vadd.f32 %v171, %v154
      %173 = vst [vmem:[#allocation7] sm:$0xff] %v172
      %s174 = scalar_lea.vmem [#allocation7], 8
      %v175 = vld [vmem:[%s174] sm:$0xff]
      %v176 = vadd.f32 %v175, %v170
      %177 = vst [vmem:[%s174] sm:$0xff] %v176
    $region25: #{tpu_custom_call.1} parent=1 // pred_fallthru
      _
    %p178 = scmp.lt.s32.totalorder %s86, 64
    // Predicated region
    $region26: #{tpu_custom_call.1} parent=1 // pred_check
      %p179 = pneg %p178
    $region27: #{tpu_custom_call.1} parent=1 // pred_check_branch
      %181 = sbr.rel (%p179) target = $region29
    $region28: #{tpu_custom_call.1} parent=1 // pred_region
      %v182 = vld [vmem:[#allocation2] sm:$0xff]
      %v183 = vld [vmem:[#allocation2 + $0x8] sm:$0xff]
      %v184 = vld [vmem:[#allocation2 + $0x10] sm:$0xff]
      %v185 = vld [vmem:[#allocation2 + $0x18] sm:$0xff]
      %v186 = vld [vmem:[#allocation2 + $0x20] sm:$0xff]
      %v187 = vld [vmem:[#allocation2 + $0x28] sm:$0xff]
      %v188 = vld [vmem:[#allocation2 + $0x30] sm:$0xff]
      %v189 = vld [vmem:[#allocation2 + $0x38] sm:$0xff]
      %v190 = vld [vmem:[#allocation5] sm:$0xff]
      %v191 = vld [vmem:[#allocation5 + $0x8] sm:$0xff]
      %v192 = vld [vmem:[#allocation5 + $0x10] sm:$0xff]
      %v193 = vld [vmem:[#allocation5 + $0x18] sm:$0xff]
      %v194 = vld [vmem:[#allocation5 + $0x20] sm:$0xff]
      %v195 = vld [vmem:[#allocation5 + $0x28] sm:$0xff]
      %v196 = vld [vmem:[#allocation5 + $0x30] sm:$0xff]
      %v197 = vld [vmem:[#allocation5 + $0x38] sm:$0xff]
      %v198 = vmul.f32 %v182, 0.5
      %v199 = vmul.f32 %v183, 0.5
      %v200 = vmul.f32 %v184, 0.5
      %v201 = vmul.f32 %v185, 0.5
      %v202 = vmul.f32 %v186, 0.5
      %v203 = vmul.f32 %v187, 0.5
      %v204 = vmul.f32 %v188, 0.5
      %v205 = vmul.f32 %v189, 0.5
      %v206 = vtanh.pop %v198
      %v207 = vtanh.pop %v199
      %v208 = vtanh.pop %v200
      %v209 = vtanh.pop %v201
      %v210 = vtanh.pop %v202
      %v211 = vtanh.pop %v203
      %v212 = vtanh.pop %v204
      %v213 = vtanh.pop %v205
      %v214 = vadd.f32 %v206, 1.0
      %v215 = vadd.f32 %v207, 1.0
      %v216 = vadd.f32 %v208, 1.0
      %v217 = vadd.f32 %v209, 1.0
      %v218 = vadd.f32 %v210, 1.0
      %v219 = vadd.f32 %v211, 1.0
      %v220 = vadd.f32 %v212, 1.0
      %v221 = vadd.f32 %v213, 1.0
      %v222 = vmul.f32 %v214, 0.5
      %v223 = vmul.f32 %v215, 0.5
      %v224 = vmul.f32 %v216, 0.5
      %v225 = vmul.f32 %v217, 0.5
      %v226 = vmul.f32 %v218, 0.5
      %v227 = vmul.f32 %v219, 0.5
      %v228 = vmul.f32 %v220, 0.5
      %v229 = vmul.f32 %v221, 0.5
      %v230 = vlaneseq
      %v231 = vshrl.u32 %v230, 7
      %v232 = vadd.s32 %v231, 8
      %v233 = vadd.s32 %v231, 16
      %v234 = vadd.s32 %v231, 24
      %v235 = vadd.s32 %v231, 32
      %v236 = vadd.s32 %v231, 40
      %v237 = vadd.s32 %v231, 48
      %v238 = vadd.s32 %v231, 56
      %v239 = vstv 0
      %v240 = vadd.s32 %v239, %v231
      %v241 = vadd.s32 %v239, %v232
      %v242 = vadd.s32 %v239, %v233
      %v243 = vadd.s32 %v239, %v234
      %v244 = vadd.s32 %v239, %v235
      %v245 = vadd.s32 %v239, %v236
      %v246 = vadd.s32 %v239, %v237
      %v247 = vadd.s32 %v239, %v238
      %v248 = vstv %s86
      %vm249 = vcmp.lt.s32.totalorder %v240, %v248
      %vm250 = vcmp.lt.s32.totalorder %v241, %v248
      %vm251 = vcmp.lt.s32.totalorder %v242, %v248
      %vm252 = vcmp.lt.s32.totalorder %v243, %v248
      %vm253 = vcmp.lt.s32.totalorder %v244, %v248
      %vm254 = vcmp.lt.s32.totalorder %v245, %v248
      %vm255 = vcmp.lt.s32.totalorder %v246, %v248
      %vm256 = vcmp.lt.s32.totalorder %v247, %v248
      %v257 = vsel %vm249, %v222, 0.0
      %v258 = vsel %vm250, %v223, 0.0
      %v259 = vsel %vm251, %v224, 0.0
      %v260 = vsel %vm252, %v225, 0.0
      %v261 = vsel %vm253, %v226, 0.0
      %v262 = vsel %vm254, %v227, 0.0
      %v263 = vsel %vm255, %v228, 0.0
      %v264 = vsel %vm256, %v229, 0.0
      %v265 = vsel %vm249, %v190, 0.0
      %v266 = vsel %vm250, %v191, 0.0
      %v267 = vsel %vm251, %v192, 0.0
      %v268 = vsel %vm252, %v193, 0.0
      %v269 = vsel %vm253, %v194, 0.0
      %v270 = vsel %vm254, %v195, 0.0
      %v271 = vsel %vm255, %v196, 0.0
      %v272 = vsel %vm256, %v197, 0.0
      %v273 = vmul.f32 %v257, %v265
      %v274 = vmul.f32 %v258, %v266
      %v275 = vmul.f32 %v259, %v267
      %v276 = vmul.f32 %v260, %v268
      %v277 = vmul.f32 %v261, %v269
      %v278 = vmul.f32 %v262, %v270
      %v279 = vmul.f32 %v263, %v271
      %v280 = vmul.f32 %v264, %v272
      %v281 = vadd.f32 %v273, %v274
      %v282 = vadd.f32 %v281, %v275
      %v283 = vadd.f32 %v282, %v276
      %v284 = vadd.f32 %v283, %v277
      %v285 = vadd.f32 %v284, %v278
      %v286 = vadd.f32 %v285, %v279
      %v287 = vadd.f32 %v286, %v280
      %v288 = vadd.f32 %v287, 0.0
      %v289 = vadd.f32 %v257, %v265
      %v290 = vadd.f32 %v258, %v266
      %v291 = vadd.f32 %v259, %v267
      %v292 = vadd.f32 %v260, %v268
      %v293 = vadd.f32 %v261, %v269
      %v294 = vadd.f32 %v262, %v270
      %v295 = vadd.f32 %v263, %v271
      %v296 = vadd.f32 %v264, %v272
      %v297 = vadd.f32 %v289, %v290
      %v298 = vadd.f32 %v297, %v291
      %v299 = vadd.f32 %v298, %v292
      %v300 = vadd.f32 %v299, %v293
      %v301 = vadd.f32 %v300, %v294
      %v302 = vadd.f32 %v301, %v295
      %v303 = vadd.f32 %v302, %v296
      %v304 = vadd.f32 %v303, 0.0
      %v305 = vld [vmem:[#allocation7] sm:$0xff]
      %v306 = vadd.f32 %v305, %v288
      %307 = vst [vmem:[#allocation7] sm:$0xff] %v306
      %s308 = scalar_lea.vmem [#allocation7], 8
      %v309 = vld [vmem:[%s308] sm:$0xff]
      %v310 = vadd.f32 %v309, %v304
      %311 = vst [vmem:[%s308] sm:$0xff] %v310
    $region29: #{tpu_custom_call.1} parent=1 // pred_fallthru
      _
    // Predicated region
    $region30: #{tpu_custom_call.1} parent=1 // pred_check
      _
    $region31: #{tpu_custom_call.1} parent=1 // pred_check_branch
      %313 = sbr.rel (0) target = $region33
    $region32: #{tpu_custom_call.1} parent=1 // pred_region
      %315 = vsyncadd [#allocation4], 0
      %s316 = sshll.u32 [#allocation7], 4
      %s317 = int_to_ptr.vmem [resolvable:$true] %s316
      %s318 = sshll.u32 %s2, 4
      %s319 = int_to_ptr.hbm [resolvable:$true] %s318
      %324 = dma.vmem_to_hbm [thread:$0]  %s317, 256, %s319, [#allocation4], 128, 128, 8
    $region33: #{tpu_custom_call.1} parent=1 // pred_fallthru
      _
    // Predicated region
    $region34: #{tpu_custom_call.1} parent=1 // pred_check
      _
    $region35: #{tpu_custom_call.1} parent=1 // pred_check_branch
      %326 = sbr.rel (0) target = $region37
    $region36: #{tpu_custom_call.1} parent=1 // pred_region
      %328 = dma.done [#allocation4], 256
    $region37: #{tpu_custom_call.1} parent=1 // pred_fallthru
      _
    %329 = vsyncpa [#allocation3], 1
    %330 = vsyncpa [#allocation6], 1
    %331 = vsyncpa [#allocation4], 1

</llo_original>
